<compile_context>
chip_gen: v7x
topology: tpu7x:2x2x1
jax: 0.10.0
libtpu: 0.0.40
codegen_flags: <defaults>
</compile_context>

<pallas_src>
import jax
import jax.numpy as jnp
from jax.experimental import pallas as pl
from jax.experimental.pallas import tpu as pltpu

DT = 0.01
LANE = 128


def _round_up(x, m):
    return ((x + m - 1) // m) * m


# --------------------------------------------------------------------------- #
# Kernel
# --------------------------------------------------------------------------- #
def make_kernel(M, H, ric_w, offs, dt):
    """Build the fused flow-step kernel with static slab offsets baked in."""

    def kernel(points_ref, ricci_ref, p_ref, out_ref):
        pts = points_ref[...]          # (B, 128)   raw points, lanes [M:) == 0
        ric = ricci_ref[...]           # (B, ric_w) flattened ricci, zero padded

        # --- normalisation (reciprocal goes to the otherwise-idle EUP slot) --
        p_norm = jnp.sqrt(jnp.sum(pts * pts, axis=1, keepdims=True))
        ps = pts * pl.reciprocal(p_norm + 1e-6, approx=True)
        r_norm = jnp.sqrt(jnp.sum(ric * ric, axis=1, keepdims=True))
        rs = ric * pl.reciprocal(r_norm + 1e-6, approx=True)

        # --- static views into the packed parameter slab (free, no copies) ---
        w1p = p_ref[offs["w1p"]:offs["w1p"] + LANE, :]      # (128, 128)
        w1r = p_ref[offs["w1r"]:offs["w1r"] + ric_w, :]     # (ric_w, 128)
        b1 = p_ref[offs["b1"]:offs["b1"] + 1, :]
        w2 = p_ref[offs["w2"]:offs["w2"] + LANE, :]
        b2 = p_ref[offs["b2"]:offs["b2"] + 1, :]
        w3 = p_ref[offs["w3"]:offs["w3"] + LANE, :]
        b3 = p_ref[offs["b3"]:offs["b3"] + 1, :]
        e1 = p_ref[offs["e1"]:offs["e1"] + LANE, :]
        eb1 = p_ref[offs["eb1"]:offs["eb1"] + 1, :]
        e2r = p_ref[offs["e2"]:offs["e2"] + 1, :]           # e2 as a (1,128) row
        eb2 = p_ref[offs["eb2"]:offs["eb2"] + 1, :]         # scalar replicated

        # --- flow network: Linear -> ReLU -> Linear -> ReLU -> Linear --------
        # concat([ps, rs]) @ W1  ==  ps @ W1p + rs @ W1r.
        h1 = (jnp.dot(ps, w1p, preferred_element_type=jnp.float32)
              + jnp.dot(rs, w1r, preferred_element_type=jnp.float32) + b1)
        h1 = jnp.maximum(h1, 0.0)                            # lanes [H:) stay 0
        h2 = jnp.maximum(
            jnp.dot(h1, w2, preferred_element_type=jnp.float32) + b2, 0.0)
        flow = jnp.tanh(
            jnp.dot(h2, w3, preferred_element_type=jnp.float32) + b3) * 100.0
        # lanes [M:) of flow are tanh(0) * 100 == 0

        # --- energy network on the RAW points; N=1 head as a VPU/XLU reduce --
        eh = jnp.maximum(
            jnp.dot(pts, e1, preferred_element_type=jnp.float32) + eb1, 0.0)
        energy = jnp.sum(eh * e2r, axis=1, keepdims=True)    # (B, 1)

        flow_norm = jnp.sqrt(jnp.sum(flow * flow, axis=1, keepdims=True))
        # TODO(synk): if a batch grid is ever added for large B, this
        # mean-over-batch term must be carried across grid steps (or moved to
        # the wrapper) instead of being a per-tile mean.
        energy_b = energy + eb2 + 0.1 * jnp.mean(flow_norm)  # (B, 128) via bcast

        # --- single lane-dense output slab: points in [0,M), energy in lane M
        lane_idx = jax.lax.broadcasted_iota(jnp.int32, out_ref.shape, 1)
        new_points = pts + dt * flow
        out_ref[...] = jnp.where(lane_idx == M, energy_b, new_points)

    return kernel


# --------------------------------------------------------------------------- #
# Parameter init + packing
# --------------------------------------------------------------------------- #
def init_params(key, manifold_dim, hidden_dim):
    """PyTorch-style init: U(-1/sqrt(fan_in), 1/sqrt(fan_in)).
    Weights stored as [in, out] (transposed vs torch.nn.Linear)."""
    m, h = manifold_dim, hidden_dim
    h2 = hidden_dim // 2
    in_dim = m + m * m

    def lin(k, fan_in, fan_out):
        kw, kb = jax.random.split(k)
        bound = 1.0 / jnp.sqrt(float(fan_in))
        w = jax.random.uniform(kw, (fan_in, fan_out), jnp.float32, -bound, bound)
        b = jax.random.uniform(kb, (1, fan_out), jnp.float32, -bound, bound)
        return w, b

    keys = jax.random.split(key, 5)
    w1, b1 = lin(keys[0], in_dim, h)     # flow_network[0]
    w2, b2 = lin(keys[1], h, h)          # flow_network[2]
    w3, b3 = lin(keys[2], h, m)          # flow_network[4]
    e1, eb1 = lin(keys[3], m, h2)        # energy_network[0]
    e2, eb2 = lin(keys[4], h2, 1)        # energy_network[2]

    # split W1 into the points part and the ricci part (avoids in-kernel concat)
    w1p, w1r = w1[:m, :], w1[m:, :]
    return dict(w1p=w1p, w1r=w1r, b1=b1, w2=w2, b2=b2, w3=w3, b3=b3,
                e1=e1, eb1=eb1, e2=e2, eb2=eb2)


def pack_params(params, M, H):
    """Pack all weights/biases into one zero-padded, lane-dense (rows,128) f32
    slab.  Every region starts on an 8-row boundary; weight regions get a full
    128 (or ric_w) rows so all in-kernel matmuls contract over a full
    lane-width (padding rows/cols are zero, so the math stays exact)."""
    assert M <= LANE and H <= LANE and (H // 2) <= LANE
    H2 = H // 2
    ric_w = _round_up(M * M, LANE)

    sizes = [("w1p", LANE), ("w1r", ric_w), ("b1", 8), ("w2", LANE),
             ("b2", 8), ("w3", LANE), ("b3", 8), ("e1", LANE),
             ("eb1", 8), ("e2", 8), ("eb2", 8)]
    offs, off = {}, 0
    for name, n in sizes:
        offs[name] = off
        off += n

    buf = jnp.zeros((off, LANE), jnp.float32)
    buf = buf.at[offs["w1p"]:offs["w1p"] + M, :H].set(params["w1p"])
    buf = buf.at[offs["w1r"]:offs["w1r"] + M * M, :H].set(params["w1r"])
    buf = buf.at[offs["b1"], :H].set(params["b1"][0])
    buf = buf.at[offs["w2"]:offs["w2"] + H, :H].set(params["w2"])
    buf = buf.at[offs["b2"], :H].set(params["b2"][0])
    buf = buf.at[offs["w3"]:offs["w3"] + H, :M].set(params["w3"])
    buf = buf.at[offs["b3"], :M].set(params["b3"][0])
    buf = buf.at[offs["e1"]:offs["e1"] + M, :H2].set(params["e1"])
    buf = buf.at[offs["eb1"], :H2].set(params["eb1"][0])
    buf = buf.at[offs["e2"], :H2].set(params["e2"][:, 0])      # (H2,1) -> row
    buf = buf.at[offs["eb2"], :].set(params["eb2"][0, 0])      # replicated scalar
    return buf, offs, ric_w


# --------------------------------------------------------------------------- #
# Wrapper
# --------------------------------------------------------------------------- #
def build_flow_step(M, H, offs, ric_w, dt=DT):
    kernel = make_kernel(M, H, ric_w, offs, dt)
    vmem = pl.BlockSpec(memory_space=pltpu.MemorySpace.VMEM)

    @jax.jit
    def flow_step(points, ricci, packed):
        """points: (B, M), ricci: (B, M, M), packed: packed parameter slab.
        Returns (new_points (B, M), energy (B,))."""
        B = points.shape[0]
        pts_pad = jnp.pad(points, ((0, 0), (0, LANE - M)))
        ric_pad = jnp.pad(ricci.reshape(B, M * M),
                          ((0, 0), (0, ric_w - M * M)))
        slab = pl.pallas_call(
            kernel,
            out_shape=jax.ShapeDtypeStruct((B, LANE), jnp.float32),
            in_specs=[vmem, vmem, vmem],
            out_specs=vmem,
        )(pts_pad, ric_pad, packed)
        return slab[:, :M], slab[:, M]

    return flow_step


# --------------------------------------------------------------------------- #
# Pure-JAX reference (mirrors FlowStepNetwork.forward)
# --------------------------------------------------------------------------- #
def flow_step_ref(points, ricci, params, dt=DT):
    B, M = points.shape
    ricci_flat = ricci.reshape(B, M * M)
    ps = points / (jnp.linalg.norm(points, axis=1, keepdims=True) + 1e-6)
    rs = ricci_flat / (jnp.linalg.norm(ricci_flat, axis=1, keepdims=True) + 1e-6)
    x = jnp.concatenate([ps, rs], axis=1)
    w1 = jnp.concatenate([params["w1p"], params["w1r"]], axis=0)
    h = jnp.maximum(x @ w1 + params["b1"], 0.0)
    h = jnp.maximum(h @ params["w2"] + params["b2"], 0.0)
    flow = jnp.tanh(h @ params["w3"] + params["b3"]) * 100.0
    new_points = points + dt * flow
    eh = jnp.maximum(points @ params["e1"] + params["eb1"], 0.0)
    energy = eh @ params["e2"] + params["eb2"]
    flow_norm = jnp.linalg.norm(flow, axis=-1, keepdims=True)
    energy = energy + 0.1 * jnp.mean(flow_norm)
    return new_points, energy.reshape(B)


# --------------------------------------------------------------------------- #
if __name__ == "__main__":
    manifold_dim = 8
    hidden_dim = 32
    batch = 8

    key = jax.random.PRNGKey(0)
    k_params, k_pts, k_ric = jax.random.split(key, 3)

    params = init_params(k_params, manifold_dim, hidden_dim)
    packed, offs, ric_w = pack_params(params, manifold_dim, hidden_dim)
    points = jax.random.normal(k_pts, (batch, manifold_dim), jnp.float32)
    ricci = jax.random.normal(k_ric, (batch, manifold_dim, manifold_dim),
                              jnp.float32)

    flow_step = build_flow_step(manifold_dim, hidden_dim, offs, ric_w, DT)
    new_points, energy = flow_step(points, ricci, packed)
    jax.block_until_ready((new_points, energy))

    ref_np, ref_e = flow_step_ref(points, ricci, params)
    # Tolerance loosened slightly vs v1: the EUP approximate reciprocal (per
    # perf review) + f32 reassociation; structural bugs would be >> 1e-2.
    err_np = float(jnp.max(jnp.abs(new_points - ref_np)))
    err_e = float(jnp.max(jnp.abs(energy - ref_e)))
    assert jnp.allclose(new_points, ref_np, atol=1e-2, rtol=1e-2), \
        f"new_points max err {err_np}"
    assert jnp.allclose(energy, ref_e, atol=1e-2, rtol=1e-2), \
        f"energy max err {err_e}"

    print("KERNEL_OK")
</pallas_src>

<mosaic_0001>
module attributes {stable_mosaic.version = 11 : i64} {
  func.func @kernel(%arg0: memref<8x128xf32, #tpu.memory_space<vmem>>, %arg1: memref<8x128xf32, #tpu.memory_space<vmem>>, %arg2: memref<688x128xf32, #tpu.memory_space<vmem>>, %arg3: memref<8x128xf32, #tpu.memory_space<vmem>>) attributes {dimension_semantics = [], scalar_prefetch = 0 : i64, scratch_operands = 0 : i64, tpu.core_type = #tpu.core_type<tc>} {
    %c0 = arith.constant 0 : index
    %c0_0 = arith.constant 0 : index
    %0 = vector.load %arg0[%c0, %c0_0] : memref<8x128xf32, #tpu.memory_space<vmem>>, vector<8x128xf32>
    %c0_1 = arith.constant 0 : index
    %c0_2 = arith.constant 0 : index
    %1 = vector.load %arg1[%c0_1, %c0_2] : memref<8x128xf32, #tpu.memory_space<vmem>>, vector<8x128xf32>
    %2 = arith.mulf %0, %0 : vector<8x128xf32>
    %cst = arith.constant dense<0.000000e+00> : vector<8xf32>
    %3 = vector.multi_reduction <add>, %2, %cst [1] : vector<8x128xf32> to vector<8xf32>
    %4 = vector.shape_cast %3 : vector<8xf32> to vector<8x1xf32>
    %5 = math.sqrt %4 : vector<8x1xf32>
    %cst_3 = arith.constant 9.99999997E-7 : f32
    %6 = vector.broadcast %cst_3 : f32 to vector<8x1xf32>
    %7 = arith.addf %5, %6 : vector<8x1xf32>
    %8 = tpu.reciprocal %7 {approx = true} : vector<8x1xf32> -> vector<8x1xf32>
    %9 = vector.broadcast %8 : vector<8x1xf32> to vector<8x128xf32>
    %10 = arith.mulf %0, %9 : vector<8x128xf32>
    %11 = arith.mulf %1, %1 : vector<8x128xf32>
    %cst_4 = arith.constant dense<0.000000e+00> : vector<8xf32>
    %12 = vector.multi_reduction <add>, %11, %cst_4 [1] : vector<8x128xf32> to vector<8xf32>
    %13 = vector.shape_cast %12 : vector<8xf32> to vector<8x1xf32>
    %14 = math.sqrt %13 : vector<8x1xf32>
    %cst_5 = arith.constant 9.99999997E-7 : f32
    %15 = vector.broadcast %cst_5 : f32 to vector<8x1xf32>
    %16 = arith.addf %14, %15 : vector<8x1xf32>
    %17 = tpu.reciprocal %16 {approx = true} : vector<8x1xf32> -> vector<8x1xf32>
    %18 = vector.broadcast %17 : vector<8x1xf32> to vector<8x128xf32>
    %19 = arith.mulf %1, %18 : vector<8x128xf32>
    %c0_6 = arith.constant 0 : index
    %c0_7 = arith.constant 0 : index
    %20 = vector.load %arg2[%c0_6, %c0_7] : memref<688x128xf32, #tpu.memory_space<vmem>>, vector<128x128xf32>
    %c128 = arith.constant 128 : index
    %c0_8 = arith.constant 0 : index
    %21 = vector.load %arg2[%c128, %c0_8] : memref<688x128xf32, #tpu.memory_space<vmem>>, vector<128x128xf32>
    %c256 = arith.constant 256 : index
    %c0_9 = arith.constant 0 : index
    %22 = vector.load %arg2[%c256, %c0_9] : memref<688x128xf32, #tpu.memory_space<vmem>>, vector<1x128xf32>
    %c264 = arith.constant 264 : index
    %c0_10 = arith.constant 0 : index
    %23 = vector.load %arg2[%c264, %c0_10] : memref<688x128xf32, #tpu.memory_space<vmem>>, vector<128x128xf32>
    %c392 = arith.constant 392 : index
    %c0_11 = arith.constant 0 : index
    %24 = vector.load %arg2[%c392, %c0_11] : memref<688x128xf32, #tpu.memory_space<vmem>>, vector<1x128xf32>
    %c400 = arith.constant 400 : index
    %c0_12 = arith.constant 0 : index
    %25 = vector.load %arg2[%c400, %c0_12] : memref<688x128xf32, #tpu.memory_space<vmem>>, vector<128x128xf32>
    %c528 = arith.constant 528 : index
    %c0_13 = arith.constant 0 : index
    %26 = vector.load %arg2[%c528, %c0_13] : memref<688x128xf32, #tpu.memory_space<vmem>>, vector<1x128xf32>
    %c536 = arith.constant 536 : index
    %c0_14 = arith.constant 0 : index
    %27 = vector.load %arg2[%c536, %c0_14] : memref<688x128xf32, #tpu.memory_space<vmem>>, vector<128x128xf32>
    %c664 = arith.constant 664 : index
    %c0_15 = arith.constant 0 : index
    %28 = vector.load %arg2[%c664, %c0_15] : memref<688x128xf32, #tpu.memory_space<vmem>>, vector<1x128xf32>
    %c672 = arith.constant 672 : index
    %c0_16 = arith.constant 0 : index
    %29 = vector.load %arg2[%c672, %c0_16] : memref<688x128xf32, #tpu.memory_space<vmem>>, vector<1x128xf32>
    %c680 = arith.constant 680 : index
    %c0_17 = arith.constant 0 : index
    %30 = vector.load %arg2[%c680, %c0_17] : memref<688x128xf32, #tpu.memory_space<vmem>>, vector<1x128xf32>
    %cst_18 = arith.constant dense<0.000000e+00> : vector<8x128xf32>
    %31 = tpu.matmul %10, %20, %cst_18 {dimension_numbers = #tpu.dot_dimension_numbers<[1], [0], [0], [1], [0, 0, 1, 1], [], []>} : vector<8x128xf32>, vector<128x128xf32>, vector<8x128xf32> -> vector<8x128xf32>
    %cst_19 = arith.constant dense<0.000000e+00> : vector<8x128xf32>
    %32 = tpu.matmul %19, %21, %cst_19 {dimension_numbers = #tpu.dot_dimension_numbers<[1], [0], [0], [1], [0, 0, 1, 1], [], []>} : vector<8x128xf32>, vector<128x128xf32>, vector<8x128xf32> -> vector<8x128xf32>
    %33 = arith.addf %31, %32 : vector<8x128xf32>
    %34 = vector.broadcast %22 : vector<1x128xf32> to vector<8x128xf32>
    %35 = arith.addf %33, %34 : vector<8x128xf32>
    %cst_20 = arith.constant 0.000000e+00 : f32
    %36 = vector.broadcast %cst_20 : f32 to vector<8x128xf32>
    %37 = arith.maximumf %35, %36 : vector<8x128xf32>
    %cst_21 = arith.constant dense<0.000000e+00> : vector<8x128xf32>
    %38 = tpu.matmul %37, %23, %cst_21 {dimension_numbers = #tpu.dot_dimension_numbers<[1], [0], [0], [1], [0, 0, 1, 1], [], []>} : vector<8x128xf32>, vector<128x128xf32>, vector<8x128xf32> -> vector<8x128xf32>
    %39 = vector.broadcast %24 : vector<1x128xf32> to vector<8x128xf32>
    %40 = arith.addf %38, %39 : vector<8x128xf32>
    %cst_22 = arith.constant 0.000000e+00 : f32
    %41 = vector.broadcast %cst_22 : f32 to vector<8x128xf32>
    %42 = arith.maximumf %40, %41 : vector<8x128xf32>
    %cst_23 = arith.constant dense<0.000000e+00> : vector<8x128xf32>
    %43 = tpu.matmul %42, %25, %cst_23 {dimension_numbers = #tpu.dot_dimension_numbers<[1], [0], [0], [1], [0, 0, 1, 1], [], []>} : vector<8x128xf32>, vector<128x128xf32>, vector<8x128xf32> -> vector<8x128xf32>
    %44 = vector.broadcast %26 : vector<1x128xf32> to vector<8x128xf32>
    %45 = arith.addf %43, %44 : vector<8x128xf32>
    %46 = math.tanh %45 : vector<8x128xf32>
    %cst_24 = arith.constant 1.000000e+02 : f32
    %47 = vector.broadcast %cst_24 : f32 to vector<8x128xf32>
    %48 = arith.mulf %46, %47 : vector<8x128xf32>
    %cst_25 = arith.constant dense<0.000000e+00> : vector<8x128xf32>
    %49 = tpu.matmul %0, %27, %cst_25 {dimension_numbers = #tpu.dot_dimension_numbers<[1], [0], [0], [1], [0, 0, 1, 1], [], []>} : vector<8x128xf32>, vector<128x128xf32>, vector<8x128xf32> -> vector<8x128xf32>
    %50 = vector.broadcast %28 : vector<1x128xf32> to vector<8x128xf32>
    %51 = arith.addf %49, %50 : vector<8x128xf32>
    %cst_26 = arith.constant 0.000000e+00 : f32
    %52 = vector.broadcast %cst_26 : f32 to vector<8x128xf32>
    %53 = arith.maximumf %51, %52 : vector<8x128xf32>
    %54 = vector.broadcast %29 : vector<1x128xf32> to vector<8x128xf32>
    %55 = arith.mulf %53, %54 : vector<8x128xf32>
    %cst_27 = arith.constant dense<0.000000e+00> : vector<8xf32>
    %56 = vector.multi_reduction <add>, %55, %cst_27 [1] : vector<8x128xf32> to vector<8xf32>
    %57 = vector.shape_cast %56 : vector<8xf32> to vector<8x1xf32>
    %58 = arith.mulf %48, %48 : vector<8x128xf32>
    %cst_28 = arith.constant dense<0.000000e+00> : vector<8xf32>
    %59 = vector.multi_reduction <add>, %58, %cst_28 [1] : vector<8x128xf32> to vector<8xf32>
    %60 = vector.shape_cast %59 : vector<8xf32> to vector<8x1xf32>
    %61 = math.sqrt %60 : vector<8x1xf32>
    %62 = vector.broadcast %57 : vector<8x1xf32> to vector<8x128xf32>
    %63 = vector.broadcast %30 : vector<1x128xf32> to vector<8x128xf32>
    %64 = arith.addf %62, %63 : vector<8x128xf32>
    %65 = vector.shape_cast %61 : vector<8x1xf32> to vector<1x8x1xf32>
    %cst_29 = arith.constant dense<0.000000e+00> : vector<1xf32>
    %66 = vector.multi_reduction <add>, %65, %cst_29 [1, 2] : vector<1x8x1xf32> to vector<1xf32>
    %67 = vector.shape_cast %66 : vector<1xf32> to vector<1x1x1xf32>
    %68 = vector.extract %67[0, 0, 0] : f32 from vector<1x1x1xf32>
    %cst_30 = arith.constant 8.000000e+00 : f32
    %69 = arith.divf %68, %cst_30 : f32
    %cst_31 = arith.constant 1.000000e-01 : f32
    %70 = arith.mulf %cst_31, %69 : f32
    %71 = vector.broadcast %70 : f32 to vector<8x128xf32>
    %72 = arith.addf %64, %71 : vector<8x128xf32>
    %73 = tpu.iota {dimensions = array<i32: 1>} : vector<8x128xi32>
    %cst_32 = arith.constant 0.00999999977 : f32
    %74 = vector.broadcast %cst_32 : f32 to vector<8x128xf32>
    %75 = arith.mulf %74, %48 : vector<8x128xf32>
    %76 = arith.addf %0, %75 : vector<8x128xf32>
    %c8_i32 = arith.constant 8 : i32
    %77 = vector.broadcast %c8_i32 : i32 to vector<8x128xi32>
    %78 = arith.cmpi eq, %73, %77 : vector<8x128xi32>
    %79 = arith.select %78, %72, %76 : vector<8x128xi1>, vector<8x128xf32>
    %c0_33 = arith.constant 0 : index
    %c0_34 = arith.constant 0 : index
    %80 = vector.load %arg3[%c0_33, %c0_34] : memref<8x128xf32, #tpu.memory_space<vmem>>, vector<8x128xf32>
    tpu.vector_store %arg3[%c0_33, %c0_34], %79 {strides = array<i32>} : memref<8x128xf32, #tpu.memory_space<vmem>>, vector<8x128xf32>,
    return
  }
}

</mosaic_0001>

<llo_original>
// kernel: flow_step.1
$region0: #{flow_step.1}
  #allocation0 [shape = 'u32[]', space=smem, size = 0x4, offset = 0x4, fixed_abs, tag = 'smem constant byte address 0x4 - core index']
  #allocation1 [shape = 'u32[144,128]{1,0:T(1,128)}', space=vmem, size = 0x12000, scoped, tag = 'internal scratch']
  %s0 = inlined_call_operand.vmem [shape: f32[8,128], index: 0, kind: input, shape index: {}]
  %s1 = inlined_call_operand.vmem [shape: f32[8,128], index: 1, kind: input, shape index: {}]
  %s2 = inlined_call_operand.hbm [shape: f32[688,128], index: 2, kind: input, shape index: {}]
  %s3 = inlined_call_operand.vmem [shape: f32[8,128], index: 3, kind: output, shape index: {}]
  %s4 = sld [smem:[#allocation0]]
  $region26: #{flow_step.1} parent=0
    _
  %s6 = ssub.s32 1, %s4
  %s7 = scalar_select 0, %s6, %s4
  $region1: #{flow_step.1} parent=0
    #allocation2 [shape = 'u8[352256]{0}', space=vmem, size = 0x56000, scoped, tag = 'input window, operand 2, single buffered']
    #allocation3 [shape = 's32[1]{0}', space=sflag, size = 0x4, scoped, tag = 'scoped memory for flow_step.1']
    %8 = vsyncpa [#allocation3], 0
    // Predicated region
    $region2: #{flow_step.1} parent=1 // pred_check
      _
    $region3: #{flow_step.1} parent=1 // pred_check_branch
      %10 = sbr.rel (0) target = $region5
    $region4: #{flow_step.1} parent=1 // pred_region
      _
    $region5: #{flow_step.1} parent=1 // pred_fallthru
      _
    // Predicated region
    $region6: #{flow_step.1} parent=1 // pred_check
      _
    $region7: #{flow_step.1} parent=1 // pred_check_branch
      %12 = sbr.rel (0) target = $region9
    $region8: #{flow_step.1} parent=1 // pred_region
      _
    $region9: #{flow_step.1} parent=1 // pred_fallthru
      _
    // Predicated region
    $region10: #{flow_step.1} parent=1 // pred_check
      _
    $region11: #{flow_step.1} parent=1 // pred_check_branch
      %14 = sbr.rel (0) target = $region13
    $region12: #{flow_step.1} parent=1 // pred_region
      %s16 = ssub.s32 11008, 11008
      %17 = vsyncadd [#allocation3], %s16
      %s18 = sshll.u32 [#allocation2], 4
      %s19 = int_to_ptr.vmem [resolvable:$true] %s18
      %24 = dma.hbm_to_vmem [thread:$0]  %s2, 11008, %s19, [#allocation3], 128, 128, 8
    $region13: #{flow_step.1} parent=1 // pred_fallthru
      _
    // Predicated region
    $region14: #{flow_step.1} parent=1 // pred_check
      _
    $region15: #{flow_step.1} parent=1 // pred_check_branch
      %26 = sbr.rel (0) target = $region17
    $region16: #{flow_step.1} parent=1 // pred_region
      %27 = dma.done [#allocation3], 11008
    $region17: #{flow_step.1} parent=1 // pred_fallthru
      _
    %v28 = vld [vmem:[%s0] sm:$0xff]
    %v29 = vld [vmem:[%s1] sm:$0xff]
    %v30 = vmul.f32 %v28, %v28
    %31 = vadd.xlane.f32.xlu0 %v30
    %v32 = vpop.xlane.xlu0 %31
    %v33 = vrsqrt.pop %v32
    %v34 = vmul.f32 %v32, %v33
    %vm35 = vcmp.eq.f32.partialorder %v32, inf
    %v36 = vsel %vm35, %v32, %v34
    %vm37 = vcmp.eq.f32.partialorder %v32, 0.0
    %v38 = vand.u32 %v32, 2147483648
    %v39 = vsel %vm37, %v38, %v36
    %v40 = vadd.f32 %v39, 1e-06
    %v41 = vrcp.pop %v40
    %v42 = vmul.f32 %v28, %v41
    %v43 = vmul.f32 %v29, %v29
    %44 = vadd.xlane.f32.xlu0 %v43
    %v45 = vpop.xlane.xlu0 %44
    %v46 = vrsqrt.pop %v45
    %v47 = vmul.f32 %v45, %v46
    %vm48 = vcmp.eq.f32.partialorder %v45, inf
    %v49 = vsel %vm48, %v45, %v47
    %vm50 = vcmp.eq.f32.partialorder %v45, 0.0
    %v51 = vand.u32 %v45, 2147483648
    %v52 = vsel %vm50, %v51, %v49
    %v53 = vadd.f32 %v52, 1e-06
    %v54 = vrcp.pop %v53
    %v55 = vmul.f32 %v29, %v54
    %v56 = vld [vmem:[#allocation2] sm:$0xff]
    %v57 = vld [vmem:[#allocation2 + $0x8] sm:$0xff]
    %v58 = vld [vmem:[#allocation2 + $0x10] sm:$0xff]
    %v59 = vld [vmem:[#allocation2 + $0x18] sm:$0xff]
    %v60 = vld [vmem:[#allocation2 + $0x20] sm:$0xff]
    %v61 = vld [vmem:[#allocation2 + $0x28] sm:$0xff]
    %v62 = vld [vmem:[#allocation2 + $0x30] sm:$0xff]
    %v63 = vld [vmem:[#allocation2 + $0x38] sm:$0xff]
    %v64 = vld [vmem:[#allocation2 + $0x40] sm:$0xff]
    %v65 = vld [vmem:[#allocation2 + $0x48] sm:$0xff]
    %v66 = vld [vmem:[#allocation2 + $0x50] sm:$0xff]
    %v67 = vld [vmem:[#allocation2 + $0x58] sm:$0xff]
    %v68 = vld [vmem:[#allocation2 + $0x60] sm:$0xff]
    %v69 = vld [vmem:[#allocation2 + $0x68] sm:$0xff]
    %v70 = vld [vmem:[#allocation2 + $0x70] sm:$0xff]
    %v71 = vld [vmem:[#allocation2 + $0x78] sm:$0xff]
    %v72 = vld [vmem:[#allocation2 + $0x80] sm:$0xff]
    %v73 = vld [vmem:[#allocation2 + $0x88] sm:$0xff]
    %v74 = vld [vmem:[#allocation2 + $0x90] sm:$0xff]
    %v75 = vld [vmem:[#allocation2 + $0x98] sm:$0xff]
    %v76 = vld [vmem:[#allocation2 + $0xa0] sm:$0xff]
    %v77 = vld [vmem:[#allocation2 + $0xa8] sm:$0xff]
    %v78 = vld [vmem:[#allocation2 + $0xb0] sm:$0xff]
    %v79 = vld [vmem:[#allocation2 + $0xb8] sm:$0xff]
    %v80 = vld [vmem:[#allocation2 + $0xc0] sm:$0xff]
    %v81 = vld [vmem:[#allocation2 + $0xc8] sm:$0xff]
    %v82 = vld [vmem:[#allocation2 + $0xd0] sm:$0xff]
    %v83 = vld [vmem:[#allocation2 + $0xd8] sm:$0xff]
    %v84 = vld [vmem:[#allocation2 + $0xe0] sm:$0xff]
    %v85 = vld [vmem:[#allocation2 + $0xe8] sm:$0xff]
    %v86 = vld [vmem:[#allocation2 + $0xf0] sm:$0xff]
    %v87 = vld [vmem:[#allocation2 + $0xf8] sm:$0xff]
    %v88 = vld [vmem:[#allocation2 + $0x100] sm:$0x1]
    %v89 = vld [vmem:[#allocation2 + $0x108] sm:$0xff]
    %v90 = vld [vmem:[#allocation2 + $0x110] sm:$0xff]
    %v91 = vld [vmem:[#allocation2 + $0x118] sm:$0xff]
    %v92 = vld [vmem:[#allocation2 + $0x120] sm:$0xff]
    %v93 = vld [vmem:[#allocation2 + $0x128] sm:$0xff]
    %v94 = vld [vmem:[#allocation2 + $0x130] sm:$0xff]
    %v95 = vld [vmem:[#allocation2 + $0x138] sm:$0xff]
    %v96 = vld [vmem:[#allocation2 + $0x140] sm:$0xff]
    %v97 = vld [vmem:[#allocation2 + $0x148] sm:$0xff]
    %v98 = vld [vmem:[#allocation2 + $0x150] sm:$0xff]
    %v99 = vld [vmem:[#allocation2 + $0x158] sm:$0xff]
    %v100 = vld [vmem:[#allocation2 + $0x160] sm:$0xff]
    %v101 = vld [vmem:[#allocation2 + $0x168] sm:$0xff]
    %v102 = vld [vmem:[#allocation2 + $0x170] sm:$0xff]
    %v103 = vld [vmem:[#allocation2 + $0x178] sm:$0xff]
    %v104 = vld [vmem:[#allocation2 + $0x180] sm:$0xff]
    %v105 = vld [vmem:[#allocation2 + $0x188] sm:$0x1]
    %v106 = vld [vmem:[#allocation2 + $0x190] sm:$0xff]
    %v107 = vld [vmem:[#allocation2 + $0x198] sm:$0xff]
    %v108 = vld [vmem:[#allocation2 + $0x1a0] sm:$0xff]
    %v109 = vld [vmem:[#allocation2 + $0x1a8] sm:$0xff]
    %v110 = vld [vmem:[#allocation2 + $0x1b0] sm:$0xff]
    %v111 = vld [vmem:[#allocation2 + $0x1b8] sm:$0xff]
    %v112 = vld [vmem:[#allocation2 + $0x1c0] sm:$0xff]
    %v113 = vld [vmem:[#allocation2 + $0x1c8] sm:$0xff]
    %v114 = vld [vmem:[#allocation2 + $0x1d0] sm:$0xff]
    %v115 = vld [vmem:[#allocation2 + $0x1d8] sm:$0xff]
    %v116 = vld [vmem:[#allocation2 + $0x1e0] sm:$0xff]
    %v117 = vld [vmem:[#allocation2 + $0x1e8] sm:$0xff]
    %v118 = vld [vmem:[#allocation2 + $0x1f0] sm:$0xff]
    %v119 = vld [vmem:[#allocation2 + $0x1f8] sm:$0xff]
    %v120 = vld [vmem:[#allocation2 + $0x200] sm:$0xff]
    %v121 = vld [vmem:[#allocation2 + $0x208] sm:$0xff]
    %v122 = vld [vmem:[#allocation2 + $0x210] sm:$0x1]
    %v123 = vld [vmem:[#allocation2 + $0x218] sm:$0xff]
    %v124 = vld [vmem:[#allocation2 + $0x220] sm:$0xff]
    %v125 = vld [vmem:[#allocation2 + $0x228] sm:$0xff]
    %v126 = vld [vmem:[#allocation2 + $0x230] sm:$0xff]
    %v127 = vld [vmem:[#allocation2 + $0x238] sm:$0xff]
    %v128 = vld [vmem:[#allocation2 + $0x240] sm:$0xff]
    %v129 = vld [vmem:[#allocation2 + $0x248] sm:$0xff]
    %v130 = vld [vmem:[#allocation2 + $0x250] sm:$0xff]
    %v131 = vld [vmem:[#allocation2 + $0x258] sm:$0xff]
    %v132 = vld [vmem:[#allocation2 + $0x260] sm:$0xff]
    %v133 = vld [vmem:[#allocation2 + $0x268] sm:$0xff]
    %v134 = vld [vmem:[#allocation2 + $0x270] sm:$0xff]
    %v135 = vld [vmem:[#allocation2 + $0x278] sm:$0xff]
    %v136 = vld [vmem:[#allocation2 + $0x280] sm:$0xff]
    %v137 = vld [vmem:[#allocation2 + $0x288] sm:$0xff]
    %v138 = vld [vmem:[#allocation2 + $0x290] sm:$0xff]
    %v139 = vld [vmem:[#allocation2 + $0x298] sm:$0x1]
    %v140 = vld [vmem:[#allocation2 + $0x2a0] sm:$0x1]
    %v141 = vld [vmem:[#allocation2 + $0x2a8] sm:$0x1]
    %142 = vmatprep.subr.mxu0 0.0
    %143 = vmatpush1.msra.mxu0 %v72
    %144 = vmatprep.subr.mxu0 0.0
    %145 = vmatpush1.msra.mxu0 %v73
    %146 = vmatprep.subr.mxu0 0.0
    %147 = vmatpush1.msra.mxu0 %v74
    %148 = vmatprep.subr.mxu0 0.0
    %149 = vmatpush1.msra.mxu0 %v75
    %150 = vmatprep.subr.mxu0 0.0
    %151 = vmatpush1.msra.mxu0 %v76
    %152 = vmatprep.subr.mxu0 0.0
    %153 = vmatpush1.msra.mxu0 %v77
    %154 = vmatprep.subr.mxu0 0.0
    %155 = vmatpush1.msra.mxu0 %v78
    %156 = vmatprep.subr.mxu0 0.0
    %157 = vmatpush1.msra.mxu0 %v79
    %158 = vmatprep.subr.mxu0 0.0
    %159 = vmatpush1.msra.mxu0 %v80
    %160 = vmatprep.subr.mxu0 0.0
    %161 = vmatpush1.msra.mxu0 %v81
    %162 = vmatprep.subr.mxu0 0.0
    %163 = vmatpush1.msra.mxu0 %v82
    %164 = vmatprep.subr.mxu0 0.0
    %165 = vmatpush1.msra.mxu0 %v83
    %166 = vmatprep.subr.mxu0 0.0
    %167 = vmatpush1.msra.mxu0 %v84
    %168 = vmatprep.subr.mxu0 0.0
    %169 = vmatpush1.msra.mxu0 %v85
    %170 = vmatprep.subr.mxu0 0.0
    %171 = vmatpush1.msra.mxu0 %v86
    %172 = vmatprep.subr.mxu0 0.0
    %173 = vmatpush1.msra.mxu0 %v87
    %174 = vmatprep.subr.mxu0 0.0
    %175 = vmatpush1.msra.mxu0 0.0
    %176 = vmatprep.subr.mxu0 0.0
    %177 = vmatpush1.msra.mxu0 0.0
    %178 = vmatprep.subr.mxu0 0.0
    %179 = vmatpush1.msra.mxu0 0.0
    %180 = vmatprep.subr.mxu0 0.0
    %181 = vmatpush1.msra.mxu0 0.0
    %182 = vmatprep.subr.mxu0 0.0
    %183 = vmatpush1.msra.mxu0 0.0
    %184 = vmatprep.subr.mxu0 0.0
    %185 = vmatpush1.msra.mxu0 0.0
    %186 = vmatprep.subr.mxu0 0.0
    %187 = vmatpush1.msra.mxu0 0.0
    %188 = vmatprep.subr.mxu0 0.0
    %189 = vmatpush1.msra.mxu0 0.0
    %190 = vmatprep.subr.mxu0 0.0
    %191 = vmatpush1.msra.mxu0 0.0
    %192 = vmatprep.subr.mxu0 0.0
    %193 = vmatpush1.msra.mxu0 0.0
    %194 = vmatprep.subr.mxu0 0.0
    %195 = vmatpush1.msra.mxu0 0.0
    %196 = vmatprep.subr.mxu0 0.0
    %197 = vmatpush1.msra.mxu0 0.0
    %198 = vmatprep.subr.mxu0 0.0
    %199 = vmatpush1.msra.mxu0 0.0
    %200 = vmatprep.subr.mxu0 0.0
    %201 = vmatpush1.msra.mxu0 0.0
    %202 = vmatprep.subr.mxu0 0.0
    %203 = vmatpush1.msra.mxu0 0.0
    %204 = vmatprep.subr.mxu0 0.0
    %205 = vmatpush1.msra.mxu0 0.0
    %206 = vmatprep.mubr.f32.mxu0 0.0
    %207 = vmatmul.mubr.f32.gmra.mrb[0].mxu0 %v55
    %v208 = vpop.f32.mrb[0].mxu0
    %v209 = vadd.f32 0.0, %v208
    %v210 = vpop.f32.mrb[0].mxu0
    %211 = vdwg.mxu0
    %212 = vmatprep.subr.mxu0 0.0
    %213 = vmatpush1.msra.mxu0 %v56
    %214 = vmatprep.subr.mxu0 0.0
    %215 = vmatpush1.msra.mxu0 %v57
    %216 = vmatprep.subr.mxu0 0.0
    %217 = vmatpush1.msra.mxu0 %v58
    %218 = vmatprep.subr.mxu0 0.0
    %219 = vmatpush1.msra.mxu0 %v59
    %220 = vmatprep.subr.mxu0 0.0
    %221 = vmatpush1.msra.mxu0 %v60
    %222 = vmatprep.subr.mxu0 0.0
    %223 = vmatpush1.msra.mxu0 %v61
    %224 = vmatprep.subr.mxu0 0.0
    %225 = vmatpush1.msra.mxu0 %v62
    %226 = vmatprep.subr.mxu0 0.0
    %227 = vmatpush1.msra.mxu0 %v63
    %228 = vmatprep.subr.mxu0 0.0
    %229 = vmatpush1.msra.mxu0 %v64
    %230 = vmatprep.subr.mxu0 0.0
    %231 = vmatpush1.msra.mxu0 %v65
    %232 = vmatprep.subr.mxu0 0.0
    %233 = vmatpush1.msra.mxu0 %v66
    %234 = vmatprep.subr.mxu0 0.0
    %235 = vmatpush1.msra.mxu0 %v67
    %236 = vmatprep.subr.mxu0 0.0
    %237 = vmatpush1.msra.mxu0 %v68
    %238 = vmatprep.subr.mxu0 0.0
    %239 = vmatpush1.msra.mxu0 %v69
    %240 = vmatprep.subr.mxu0 0.0
    %241 = vmatpush1.msra.mxu0 %v70
    %242 = vmatprep.subr.mxu0 0.0
    %243 = vmatpush1.msra.mxu0 %v71
    %244 = vmatprep.subr.mxu0 0.0
    %245 = vmatpush1.msra.mxu0 0.0
    %246 = vmatprep.subr.mxu0 0.0
    %247 = vmatpush1.msra.mxu0 0.0
    %248 = vmatprep.subr.mxu0 0.0
    %249 = vmatpush1.msra.mxu0 0.0
    %250 = vmatprep.subr.mxu0 0.0
    %251 = vmatpush1.msra.mxu0 0.0
    %252 = vmatprep.subr.mxu0 0.0
    %253 = vmatpush1.msra.mxu0 0.0
    %254 = vmatprep.subr.mxu0 0.0
    %255 = vmatpush1.msra.mxu0 0.0
    %256 = vmatprep.subr.mxu0 0.0
    %257 = vmatpush1.msra.mxu0 0.0
    %258 = vmatprep.subr.mxu0 0.0
    %259 = vmatpush1.msra.mxu0 0.0
    %260 = vmatprep.subr.mxu0 0.0
    %261 = vmatpush1.msra.mxu0 0.0
    %262 = vmatprep.subr.mxu0 0.0
    %263 = vmatpush1.msra.mxu0 0.0
    %264 = vmatprep.subr.mxu0 0.0
    %265 = vmatpush1.msra.mxu0 0.0
    %266 = vmatprep.subr.mxu0 0.0
    %267 = vmatpush1.msra.mxu0 0.0
    %268 = vmatprep.subr.mxu0 0.0
    %269 = vmatpush1.msra.mxu0 0.0
    %270 = vmatprep.subr.mxu0 0.0
    %271 = vmatpush1.msra.mxu0 0.0
    %272 = vmatprep.subr.mxu0 0.0
    %273 = vmatpush1.msra.mxu0 0.0
    %274 = vmatprep.subr.mxu0 0.0
    %275 = vmatpush1.msra.mxu0 0.0
    %276 = vmatprep.mubr.f32.mxu0 0.0
    %277 = vmatmul.mubr.f32.gmra.mrb[0].mxu0 %v42
    %v278 = vpop.f32.mrb[0].mxu0
    %v279 = vadd.f32 %v209, %v278
    %v280 = vpop.f32.mrb[0].mxu0
    %281 = vdwg.mxu0
    %v282 = vlaneseq
    %v283 = vshrl.u32 %v282, 7
    %v284 = vsub.s32 0, %v283
    %v285 = vrot.slane %v88, %v284
    %v286 = vadd.f32 %v279, %v285
    %v287 = vmax.f32 %v286, 0.0
    %v288 = vlaneseq
    %v289 = vshrl.u32 %v288, 7
    %v290 = vsub.s32 0, %v289
    %v291 = vrot.slane %v105, %v290
    %292 = vmatprep.subr.mxu0 0.0
    %293 = vmatpush1.msra.mxu0 %v89
    %294 = vmatprep.subr.mxu0 0.0
    %295 = vmatpush1.msra.mxu0 %v90
    %296 = vmatprep.subr.mxu0 0.0
    %297 = vmatpush1.msra.mxu0 %v91
    %298 = vmatprep.subr.mxu0 0.0
    %299 = vmatpush1.msra.mxu0 %v92
    %300 = vmatprep.subr.mxu0 0.0
    %301 = vmatpush1.msra.mxu0 %v93
    %302 = vmatprep.subr.mxu0 0.0
    %303 = vmatpush1.msra.mxu0 %v94
    %304 = vmatprep.subr.mxu0 0.0
    %305 = vmatpush1.msra.mxu0 %v95
    %306 = vmatprep.subr.mxu0 0.0
    %307 = vmatpush1.msra.mxu0 %v96
    %308 = vmatprep.subr.mxu0 0.0
    %309 = vmatpush1.msra.mxu0 %v97
    %310 = vmatprep.subr.mxu0 0.0
    %311 = vmatpush1.msra.mxu0 %v98
    %312 = vmatprep.subr.mxu0 0.0
    %313 = vmatpush1.msra.mxu0 %v99
    %314 = vmatprep.subr.mxu0 0.0
    %315 = vmatpush1.msra.mxu0 %v100
    %316 = vmatprep.subr.mxu0 0.0
    %317 = vmatpush1.msra.mxu0 %v101
    %318 = vmatprep.subr.mxu0 0.0
    %319 = vmatpush1.msra.mxu0 %v102
    %320 = vmatprep.subr.mxu0 0.0
    %321 = vmatpush1.msra.mxu0 %v103
    %322 = vmatprep.subr.mxu0 0.0
    %323 = vmatpush1.msra.mxu0 %v104
    %324 = vmatprep.subr.mxu0 0.0
    %325 = vmatpush1.msra.mxu0 0.0
    %326 = vmatprep.subr.mxu0 0.0
    %327 = vmatpush1.msra.mxu0 0.0
    %328 = vmatprep.subr.mxu0 0.0
    %329 = vmatpush1.msra.mxu0 0.0
    %330 = vmatprep.subr.mxu0 0.0
    %331 = vmatpush1.msra.mxu0 0.0
    %332 = vmatprep.subr.mxu0 0.0
    %333 = vmatpush1.msra.mxu0 0.0
    %334 = vmatprep.subr.mxu0 0.0
    %335 = vmatpush1.msra.mxu0 0.0
    %336 = vmatprep.subr.mxu0 0.0
    %337 = vmatpush1.msra.mxu0 0.0
    %338 = vmatprep.subr.mxu0 0.0
    %339 = vmatpush1.msra.mxu0 0.0
    %340 = vmatprep.subr.mxu0 0.0
    %341 = vmatpush1.msra.mxu0 0.0
    %342 = vmatprep.subr.mxu0 0.0
    %343 = vmatpush1.msra.mxu0 0.0
    %344 = vmatprep.subr.mxu0 0.0
    %345 = vmatpush1.msra.mxu0 0.0
    %346 = vmatprep.subr.mxu0 0.0
    %347 = vmatpush1.msra.mxu0 0.0
    %348 = vmatprep.subr.mxu0 0.0
    %349 = vmatpush1.msra.mxu0 0.0
    %350 = vmatprep.subr.mxu0 0.0
    %351 = vmatpush1.msra.mxu0 0.0
    %352 = vmatprep.subr.mxu0 0.0
    %353 = vmatpush1.msra.mxu0 0.0
    %354 = vmatprep.subr.mxu0 0.0
    %355 = vmatpush1.msra.mxu0 0.0
    %356 = vmatprep.mubr.f32.mxu0 0.0
    %357 = vmatmul.mubr.f32.gmra.mrb[0].mxu0 %v287
    %v358 = vpop.f32.mrb[0].mxu0
    %v359 = vadd.f32 %v291, %v358
    %v360 = vpop.f32.mrb[0].mxu0
    %361 = vdwg.mxu0
    %v362 = vmax.f32 %v359, 0.0
    %v363 = vlaneseq
    %v364 = vshrl.u32 %v363, 7
    %v365 = vsub.s32 0, %v364
    %v366 = vrot.slane %v122, %v365
    %367 = vmatprep.subr.mxu0 0.0
    %368 = vmatpush1.msra.mxu0 %v106
    %369 = vmatprep.subr.mxu0 0.0
    %370 = vmatpush1.msra.mxu0 %v107
    %371 = vmatprep.subr.mxu0 0.0
    %372 = vmatpush1.msra.mxu0 %v108
    %373 = vmatprep.subr.mxu0 0.0
    %374 = vmatpush1.msra.mxu0 %v109
    %375 = vmatprep.subr.mxu0 0.0
    %376 = vmatpush1.msra.mxu0 %v110
    %377 = vmatprep.subr.mxu0 0.0
    %378 = vmatpush1.msra.mxu0 %v111
    %379 = vmatprep.subr.mxu0 0.0
    %380 = vmatpush1.msra.mxu0 %v112
    %381 = vmatprep.subr.mxu0 0.0
    %382 = vmatpush1.msra.mxu0 %v113
    %383 = vmatprep.subr.mxu0 0.0
    %384 = vmatpush1.msra.mxu0 %v114
    %385 = vmatprep.subr.mxu0 0.0
    %386 = vmatpush1.msra.mxu0 %v115
    %387 = vmatprep.subr.mxu0 0.0
    %388 = vmatpush1.msra.mxu0 %v116
    %389 = vmatprep.subr.mxu0 0.0
    %390 = vmatpush1.msra.mxu0 %v117
    %391 = vmatprep.subr.mxu0 0.0
    %392 = vmatpush1.msra.mxu0 %v118
    %393 = vmatprep.subr.mxu0 0.0
    %394 = vmatpush1.msra.mxu0 %v119
    %395 = vmatprep.subr.mxu0 0.0
    %396 = vmatpush1.msra.mxu0 %v120
    %397 = vmatprep.subr.mxu0 0.0
    %398 = vmatpush1.msra.mxu0 %v121
    %399 = vmatprep.subr.mxu0 0.0
    %400 = vmatpush1.msra.mxu0 0.0
    %401 = vmatprep.subr.mxu0 0.0
    %402 = vmatpush1.msra.mxu0 0.0
    %403 = vmatprep.subr.mxu0 0.0
    %404 = vmatpush1.msra.mxu0 0.0
    %405 = vmatprep.subr.mxu0 0.0
    %406 = vmatpush1.msra.mxu0 0.0
    %407 = vmatprep.subr.mxu0 0.0
    %408 = vmatpush1.msra.mxu0 0.0
    %409 = vmatprep.subr.mxu0 0.0
    %410 = vmatpush1.msra.mxu0 0.0
    %411 = vmatprep.subr.mxu0 0.0
    %412 = vmatpush1.msra.mxu0 0.0
    %413 = vmatprep.subr.mxu0 0.0
    %414 = vmatpush1.msra.mxu0 0.0
    %415 = vmatprep.subr.mxu0 0.0
    %416 = vmatpush1.msra.mxu0 0.0
    %417 = vmatprep.subr.mxu0 0.0
    %418 = vmatpush1.msra.mxu0 0.0
    %419 = vmatprep.subr.mxu0 0.0
    %420 = vmatpush1.msra.mxu0 0.0
    %421 = vmatprep.subr.mxu0 0.0
    %422 = vmatpush1.msra.mxu0 0.0
    %423 = vmatprep.subr.mxu0 0.0
    %424 = vmatpush1.msra.mxu0 0.0
    %425 = vmatprep.subr.mxu0 0.0
    %426 = vmatpush1.msra.mxu0 0.0
    %427 = vmatprep.subr.mxu0 0.0
    %428 = vmatpush1.msra.mxu0 0.0
    %429 = vmatprep.subr.mxu0 0.0
    %430 = vmatpush1.msra.mxu0 0.0
    %431 = vmatprep.mubr.f32.mxu0 0.0
    %432 = vmatmul.mubr.f32.gmra.mrb[0].mxu0 %v362
    %v433 = vpop.f32.mrb[0].mxu0
    %v434 = vadd.f32 %v366, %v433
    %v435 = vpop.f32.mrb[0].mxu0
    %436 = vdwg.mxu0
    %v437 = vtanh.pop %v434
    %v438 = vmul.f32 %v437, 100.0
    %v439 = vlaneseq
    %v440 = vshrl.u32 %v439, 7
    %v441 = vsub.s32 0, %v440
    %v442 = vrot.slane %v139, %v441
    %443 = vmatprep.subr.mxu0 0.0
    %444 = vmatpush1.msra.mxu0 %v123
    %445 = vmatprep.subr.mxu0 0.0
    %446 = vmatpush1.msra.mxu0 %v124
    %447 = vmatprep.subr.mxu0 0.0
    %448 = vmatpush1.msra.mxu0 %v125
    %449 = vmatprep.subr.mxu0 0.0
    %450 = vmatpush1.msra.mxu0 %v126
    %451 = vmatprep.subr.mxu0 0.0
    %452 = vmatpush1.msra.mxu0 %v127
    %453 = vmatprep.subr.mxu0 0.0
    %454 = vmatpush1.msra.mxu0 %v128
    %455 = vmatprep.subr.mxu0 0.0
    %456 = vmatpush1.msra.mxu0 %v129
    %457 = vmatprep.subr.mxu0 0.0
    %458 = vmatpush1.msra.mxu0 %v130
    %459 = vmatprep.subr.mxu0 0.0
    %460 = vmatpush1.msra.mxu0 %v131
    %461 = vmatprep.subr.mxu0 0.0
    %462 = vmatpush1.msra.mxu0 %v132
    %463 = vmatprep.subr.mxu0 0.0
    %464 = vmatpush1.msra.mxu0 %v133
    %465 = vmatprep.subr.mxu0 0.0
    %466 = vmatpush1.msra.mxu0 %v134
    %467 = vmatprep.subr.mxu0 0.0
    %468 = vmatpush1.msra.mxu0 %v135
    %469 = vmatprep.subr.mxu0 0.0
    %470 = vmatpush1.msra.mxu0 %v136
    %471 = vmatprep.subr.mxu0 0.0
    %472 = vmatpush1.msra.mxu0 %v137
    %473 = vmatprep.subr.mxu0 0.0
    %474 = vmatpush1.msra.mxu0 %v138
    %475 = vmatprep.subr.mxu0 0.0
    %476 = vmatpush1.msra.mxu0 0.0
    %477 = vmatprep.subr.mxu0 0.0
    %478 = vmatpush1.msra.mxu0 0.0
    %479 = vmatprep.subr.mxu0 0.0
    %480 = vmatpush1.msra.mxu0 0.0
    %481 = vmatprep.subr.mxu0 0.0
    %482 = vmatpush1.msra.mxu0 0.0
    %483 = vmatprep.subr.mxu0 0.0
    %484 = vmatpush1.msra.mxu0 0.0
    %485 = vmatprep.subr.mxu0 0.0
    %486 = vmatpush1.msra.mxu0 0.0
    %487 = vmatprep.subr.mxu0 0.0
    %488 = vmatpush1.msra.mxu0 0.0
    %489 = vmatprep.subr.mxu0 0.0
    %490 = vmatpush1.msra.mxu0 0.0
    %491 = vmatprep.subr.mxu0 0.0
    %492 = vmatpush1.msra.mxu0 0.0
    %493 = vmatprep.subr.mxu0 0.0
    %494 = vmatpush1.msra.mxu0 0.0
    %495 = vmatprep.subr.mxu0 0.0
    %496 = vmatpush1.msra.mxu0 0.0
    %497 = vmatprep.subr.mxu0 0.0
    %498 = vmatpush1.msra.mxu0 0.0
    %499 = vmatprep.subr.mxu0 0.0
    %500 = vmatpush1.msra.mxu0 0.0
    %501 = vmatprep.subr.mxu0 0.0
    %502 = vmatpush1.msra.mxu0 0.0
    %503 = vmatprep.subr.mxu0 0.0
    %504 = vmatpush1.msra.mxu0 0.0
    %505 = vmatprep.subr.mxu0 0.0
    %506 = vmatpush1.msra.mxu0 0.0
    %507 = vmatprep.mubr.f32.mxu0 0.0
    %508 = vmatmul.mubr.f32.gmra.mrb[0].mxu0 %v28
    %v509 = vpop.f32.mrb[0].mxu0
    %v510 = vadd.f32 %v442, %v509
    %v511 = vpop.f32.mrb[0].mxu0
    %512 = vdwg.mxu0
    %v513 = vmax.f32 %v510, 0.0
    %v514 = vlaneseq
    %v515 = vshrl.u32 %v514, 7
    %v516 = vsub.s32 0, %v515
    %v517 = vrot.slane %v140, %v516
    %v518 = vmul.f32 %v513, %v517
    %519 = vadd.xlane.f32.xlu0 %v518
    %v520 = vpop.xlane.xlu0 %519
    %v521 = vmul.f32 %v438, %v438
    %522 = vadd.xlane.f32.xlu0 %v521
    %v523 = vpop.xlane.xlu0 %522
    %v524 = vrsqrt.pop %v523
    %v525 = vmul.f32 %v523, %v524
    %vm526 = vcmp.eq.f32.partialorder %v523, inf
    %v527 = vsel %vm526, %v523, %v525
    %vm528 = vcmp.eq.f32.partialorder %v523, 0.0
    %v529 = vand.u32 %v523, 2147483648
    %v530 = vsel %vm528, %v529, %v527
    %v531 = vlaneseq
    %v532 = vshrl.u32 %v531, 7
    %v533 = vsub.s32 0, %v532
    %v534 = vrot.slane %v141, %v533
    %v535 = vadd.f32 %v520, %v534
    %vm536 = vcmask 7168
    %v537 = vsel %vm536, %v530, 0.0
    %538 = vadd.xlane.f32.xlu0 %v537
    %v539 = vpop.xlane.xlu0 %538
    %v540 = vrot.slane %v539, 4
    %v541 = vadd.f32 %v539, %v540
    %v542 = vrot.slane %v541, 2
    %v543 = vadd.f32 %v541, %v542
    %v544 = vrot.slane %v543, 1
    %v545 = vadd.f32 %v543, %v544
    %s546 = vtos %v545
    %v547 = vrcp.pop 8.0
    %s548 = vtos %v547
    %s549 = smul.f32 %s546, %s548
    %s550 = smul.f32 %s549, 0.1
    %v551 = vstv %s550
    %v552 = vadd.f32 %v535, %v551
    %v553 = vlaneseq
    %v554 = vand.u32 %v553, 127
    %v555 = vmul.f32 %v438, 0.01
    %v556 = vadd.f32 %v28, %v555
    %vm557 = vcmp.eq.s32.totalorder %v554, 8
    %v558 = vsel %vm557, %v552, %v556
    %559 = vst [vmem:[%s3] sm:$0xff] %v558
    // Predicated region
    $region18: #{flow_step.1} parent=1 // pred_check
      _
    $region19: #{flow_step.1} parent=1 // pred_check_branch
      %561 = sbr.rel (0) target = $region21
    $region20: #{flow_step.1} parent=1 // pred_region
      _
    $region21: #{flow_step.1} parent=1 // pred_fallthru
      _
    // Predicated region
    $region22: #{flow_step.1} parent=1 // pred_check
      _
    $region23: #{flow_step.1} parent=1 // pred_check_branch
      %563 = sbr.rel (0) target = $region25
    $region24: #{flow_step.1} parent=1 // pred_region
      _
    $region25: #{flow_step.1} parent=1 // pred_fallthru
      _
    %564 = vsyncpa [#allocation3], 1

</llo_original>
